<compile_context>
chip_gen: v5e
topology: v5e:2x2
jax: 0.10.0
libtpu: 0.0.40
codegen_flags: <defaults>
</compile_context>

<pallas_src>
import functools

import jax
import jax.numpy as jnp
from jax import lax
from jax.experimental import pallas as pl
from jax.experimental.pallas import tpu as pltpu

_MIB = 1024 * 1024


def _round_up(a, b):
    return (a + b - 1) // b * b


def _cdiv(a, b):
    return -(-a // b)


def _vmem_capacity_bytes():
    """Physical VMEM capacity; conservative (v7x, 64 MiB/core) fallback."""
    try:
        info = pltpu.get_tpu_info()
        cap = getattr(info, "vmem_capacity_bytes", None)
        if cap:
            return int(cap)
    except Exception:
        pass
    return 64 * _MIB


def _budgets(itemsize):
    """(fused per-block budget, per-tile budget, scoped-vmem cap) in bytes."""
    capacity = _vmem_capacity_bytes()
    cap = min(capacity * 4 // 5, 104 * _MIB)            # scoped VMEM we will request
    # Fused path keeps 2x(in)+2x(out) double-buffered blocks plus a possible
    # f32 accumulation temp for sub-f32 inputs under `cap` with headroom.
    extra = (4 // itemsize) if itemsize < 4 else 0
    fused = max((cap - 6 * _MIB) // (4 + extra), 2 * _MIB)
    tile = max(cap // 12, 2 * _MIB)
    return fused, tile, cap


def _padded_slab_bytes(c, hw, dtype):
    """Bytes of one (C, HW) slab after physical (sublane, 128-lane) padding."""
    itemsize = dtype.itemsize
    sublane = 32 // itemsize                            # 8 f32, 16 bf16, 32 int8
    return _round_up(c, sublane) * _round_up(hw, 128) * itemsize


def _vmem_limit(need, cap):
    return int(min(max(need, 16 * _MIB), cap))


# ----------------------------------------------------------------------------
# Fused single-pass kernel: block = (nb, C, HW) (full trailing extents).
# Each element is read once and written once (HBM-roofline optimum).
# ----------------------------------------------------------------------------
def _gct_fused_kernel(x_ref, o_ref, *, k, eps, inv_hw):
    x = x_ref[...]                                                    # (nb, C, HW)
    y = jnp.sum(x, axis=-1, keepdims=True, dtype=jnp.float32) * inv_hw  # (nb, C, 1)
    mean = jnp.mean(y, axis=1, keepdims=True)
    mean_x2 = jnp.mean(y * y, axis=1, keepdims=True)
    var = jnp.maximum(mean_x2 - mean * mean, 0.0)
    y_norm = (y - mean) * lax.rsqrt(var + eps)
    gate = jnp.exp(-(y_norm * y_norm) * k)                            # (nb, C, 1)
    o_ref[...] = (x * gate.astype(x.dtype)).astype(o_ref.dtype)


def _pick_nb(n, per_batch_bytes, budget):
    """Batch elements per block: prefer >=4 (even) grid steps with >=1 MiB blocks."""
    divisors = [d for d in range(1, n + 1)
                if n % d == 0 and d * per_batch_bytes <= budget]
    if not divisors:
        return 1
    min_block = 1 * _MIB
    preds = (
        lambda d: (n // d) >= 4 and (n // d) % 2 == 0 and d * per_batch_bytes >= min_block,
        lambda d: (n // d) >= 4 and d * per_batch_bytes >= min_block,
        lambda d: (n // d) >= 2,
    )
    for pred in preds:
        cand = [d for d in divisors if pred(d)]
        if cand:
            return max(cand)
    return max(divisors)


def _gct_fused(x3, k, eps, fused_budget, cap):
    n, c, hw = x3.shape
    itemsize = x3.dtype.itemsize
    per_batch = _padded_slab_bytes(c, hw, x3.dtype)
    nb = _pick_nb(n, per_batch, fused_budget)
    block = nb * per_batch
    f32_temp = block * (4 // itemsize) if itemsize < 4 else 0
    limit = _vmem_limit(4 * block + f32_temp + 4 * _MIB, cap)

    kernel = functools.partial(_gct_fused_kernel, k=k, eps=eps, inv_hw=1.0 / hw)
    return pl.pallas_call(
        kernel,
        out_shape=jax.ShapeDtypeStruct((n, c, hw), x3.dtype),
        grid_spec=pltpu.PrefetchScalarGridSpec(
            num_scalar_prefetch=0,
            grid=(n // nb,),
            in_specs=[pl.BlockSpec((nb, c, hw), lambda i: (i, 0, 0))],
            out_specs=pl.BlockSpec((nb, c, hw), lambda i: (i, 0, 0)),
        ),
        compiler_params=pltpu.CompilerParams(
            dimension_semantics=("parallel",),
            vmem_limit_bytes=limit,
        ),
    )(x3)


# ----------------------------------------------------------------------------
# HW-tiled two-pass fallback for large feature maps.
#   Pass 1: per-(split, batch, channel) spatial partial sums (f32, lane-dense),
#           ragged tail lanes masked in-kernel (no XLA pad copy).
#   Pass 2: combine partial sums -> gaussian gate (tiny, per tile) and do the
#           broadcast multiply, writing the un-padded output shape (no slice).
# ----------------------------------------------------------------------------
def _gct_sums_kernel(x_ref, sum_ref, *, hw, thw, n_hw_half, ragged):
    j = pl.program_id(2)

    @pl.when(j == 0)
    def _init():
        sum_ref[...] = jnp.zeros_like(sum_ref)

    x = x_ref[...]                                                    # (1, C, thw)
    if ragged:
        # Mask lanes past the true spatial extent (covers the ragged last tile
        # and the duplicated clamped tile of an overshooting split).
        tile_id = pl.program_id(0) * n_hw_half + j
        lane = lax.broadcasted_iota(jnp.int32, x.shape, 2)
        x = jnp.where(tile_id * thw + lane < hw, x, jnp.zeros((), x.dtype))
    partial = jnp.sum(x, axis=-1, dtype=jnp.float32)                  # (1, C)
    sum_ref[...] += partial[:, None, None, :]                         # (1, 1, 1, C)


def _gct_scale_kernel(x_ref, sum_ref, o_ref, *, k, eps, inv_hw):
    c = x_ref.shape[1]
    # Combine split partial sums and turn them into the gate (C elems: cheap).
    y = jnp.sum(sum_ref[...], axis=0) * inv_hw                        # (1, 1, C)
    mean = jnp.mean(y, axis=-1, keepdims=True)
    mean_x2 = jnp.mean(y * y, axis=-1, keepdims=True)
    var = jnp.maximum(mean_x2 - mean * mean, 0.0)
    y_norm = (y - mean) * lax.rsqrt(var + eps)
    gate = jnp.exp(-(y_norm * y_norm) * k)                            # (1, 1, C)
    x = x_ref[...]                                                    # (1, C, thw)
    g = jnp.transpose(gate, (0, 2, 1)).astype(x.dtype)                # (1, C, 1)
    o_ref[...] = (x * g).astype(o_ref.dtype)


def _gct_tiled(x3, k, eps, tile_budget, cap, max_tile_hw=None):
    n, c, hw = x3.shape
    dtype = x3.dtype
    itemsize = dtype.itemsize
    sublane = 32 // itemsize
    c_pad = _round_up(c, sublane)

    # Lane-dense HW tile: largest 128-multiple whose padded (C, thw) slab fits.
    max_hw = max(tile_budget // (c_pad * itemsize), 128)
    thw = max((max_hw // 128) * 128, 128)
    thw = min(thw, _round_up(hw, 128))
    if max_tile_hw is not None:                      # test / tuning knob
        thw = max(min(thw, (max_tile_hw // 128) * 128), 128)
    n_hw = _cdiv(hw, thw)

    # Split the reduction across two parallel chunks for batch-1 inference so
    # both v7x TensorCores share pass 1 (harmless on single-core chips).
    n_split = 2 if (n == 1 and n_hw >= 2) else 1
    n_hw_half = _cdiv(n_hw, n_split)
    ragged = (n_hw * thw != hw) or (n_split * n_hw_half != n_hw)

    tile_bytes = c_pad * thw * itemsize
    f32_temp = tile_bytes * (4 // itemsize) if itemsize < 4 else 0
    last_block = n_hw - 1

    # ---------------- Pass 1: partial spatial sums ----------------
    def x_map_p1(s, b, j):
        tile = s * n_hw_half + j
        if ragged:
            tile = jnp.minimum(tile, last_block)     # overshooting split tile
        return (b, 0, tile)

    sums_kernel = functools.partial(
        _gct_sums_kernel, hw=hw, thw=thw, n_hw_half=n_hw_half, ragged=ragged)
    sums = pl.pallas_call(
        sums_kernel,
        out_shape=jax.ShapeDtypeStruct((n_split, n, 1, c), jnp.float32),
        grid_spec=pltpu.PrefetchScalarGridSpec(
            num_scalar_prefetch=0,
            grid=(n_split, n, n_hw_half),
            in_specs=[pl.BlockSpec((1, c, thw), x_map_p1)],
            out_specs=pl.BlockSpec((1, 1, 1, c), lambda s, b, j: (s, b, 0, 0)),
        ),
        compiler_params=pltpu.CompilerParams(
            dimension_semantics=("parallel", "parallel", "arbitrary"),
            vmem_limit_bytes=_vmem_limit(3 * tile_bytes + f32_temp + 4 * _MIB, cap),
        ),
    )(x3)

    # ---------------- Pass 2: broadcast gate multiply ----------------
    scale_kernel = functools.partial(_gct_scale_kernel, k=k, eps=eps, inv_hw=1.0 / hw)
    out = pl.pallas_call(
        scale_kernel,
        out_shape=jax.ShapeDtypeStruct((n, c, hw), dtype),
        grid_spec=pltpu.PrefetchScalarGridSpec(
            num_scalar_prefetch=0,
            grid=(n, n_hw),
            in_specs=[
                pl.BlockSpec((1, c, thw), lambda b, j: (b, 0, j)),
                pl.BlockSpec((n_split, 1, 1, c), lambda b, j: (0, b, 0, 0)),
            ],
            out_specs=pl.BlockSpec((1, c, thw), lambda b, j: (b, 0, j)),
        ),
        compiler_params=pltpu.CompilerParams(
            dimension_semantics=("parallel", "parallel"),
            vmem_limit_bytes=_vmem_limit(5 * tile_bytes + 4 * _MIB, cap),
        ),
    )(x3, sums)
    return out


# ----------------------------------------------------------------------------
# Public entry point.
# ----------------------------------------------------------------------------
def gct(x, c=2.0, eps=1e-5, force_path=None, max_tile_hw=None):
    """GCT forward. x: (N, C, H, W). Returns same shape/dtype."""
    n, ch, h, w = x.shape
    hw = h * w
    x3 = x.reshape(n, ch, hw)
    k = float(c) / 2.0                              # fold the /2 * c constant
    eps = float(eps)

    fused_budget, tile_budget, cap = _budgets(x3.dtype.itemsize)
    per_batch = _padded_slab_bytes(ch, hw, x3.dtype)

    path = force_path
    if path is None:
        path = "fused" if per_batch <= fused_budget else "tiled"

    if path == "fused":
        out3 = _gct_fused(x3, k, eps, fused_budget, cap)
    else:
        out3 = _gct_tiled(x3, k, eps, tile_budget, cap, max_tile_hw=max_tile_hw)
    return out3.reshape(n, ch, h, w)


def gct_reference(x, c=2.0, eps=1e-5):
    """Plain-JAX reference mirroring the PyTorch module."""
    y = jnp.mean(x, axis=(2, 3), keepdims=True)
    mean = jnp.mean(y, axis=1, keepdims=True)
    mean_x2 = jnp.mean(y * y, axis=1, keepdims=True)
    var = mean_x2 - mean * mean
    y_norm = (y - mean) / jnp.sqrt(var + eps)
    y_transform = jnp.exp(-(y_norm * y_norm / 2.0 * c))
    return x * y_transform


if __name__ == "__main__":
    key0, key1, key2, key3 = jax.random.split(jax.random.PRNGKey(0), 4)

    # 1) Fused single-pass path (f32).
    x = jax.random.normal(key0, (2, 4, 16, 16), dtype=jnp.float32)
    out = jax.block_until_ready(gct(x, c=2.0, eps=1e-5))
    ref = gct_reference(x, c=2.0, eps=1e-5)
    assert out.shape == (2, 4, 16, 16) and out.dtype == x.dtype
    assert jnp.allclose(out, ref, atol=1e-5, rtol=1e-5), "fused f32 mismatch"

    # 2) Fused path, bf16 input (gate cast to bf16 before multiply -> looser tol).
    xb = jax.random.normal(key1, (4, 8, 16, 16), dtype=jnp.bfloat16)
    outb = jax.block_until_ready(gct(xb, c=2.0, eps=1e-5))
    refb = gct_reference(xb.astype(jnp.float32), c=2.0, eps=1e-5)
    assert outb.shape == xb.shape and outb.dtype == xb.dtype
    assert jnp.allclose(outb.astype(jnp.float32), refb, atol=3e-2, rtol=3e-2), \
        "fused bf16 mismatch"

    # 3) Tiled two-pass fallback with ragged (non-128-multiple) HW handled by
    #    in-kernel lane masking — no pad / slice copies.
    x2 = jax.random.normal(key2, (2, 5, 13, 13), dtype=jnp.float32)
    out2 = jax.block_until_ready(gct(x2, c=2.0, eps=1e-5, force_path="tiled"))
    ref2 = gct_reference(x2, c=2.0, eps=1e-5)
    assert out2.shape == (2, 5, 13, 13)
    assert jnp.allclose(out2, ref2, atol=1e-5, rtol=1e-5), "tiled path mismatch"

    # 4) Tiled path with N=1: reduction split across two parallel grid chunks
    #    (feeds both v7x TensorCores), ragged last tile + overshooting split.
    x4 = jax.random.normal(key3, (1, 16, 40, 40), dtype=jnp.float32)
    out4 = jax.block_until_ready(
        gct(x4, c=2.0, eps=1e-5, force_path="tiled", max_tile_hw=256))
    ref4 = gct_reference(x4, c=2.0, eps=1e-5)
    assert out4.shape == (1, 16, 40, 40)
    assert jnp.allclose(out4, ref4, atol=1e-5, rtol=1e-5), "tiled split path mismatch"

    print("KERNEL_OK")
</pallas_src>

<mosaic_0001>
module attributes {stable_mosaic.version = 11 : i64} {
  func.func @_gct_fused_kernel(%arg0: i32, %arg1: memref<1x4x256xf32, #tpu.memory_space<vmem>>, %arg2: memref<1x4x256xf32, #tpu.memory_space<vmem>>) attributes {dimension_semantics = [#tpu.dimension_semantics<parallel>], iteration_bounds = array<i64: 2>, scalar_prefetch = 0 : i64, scratch_operands = 0 : i64, tpu.core_type = #tpu.core_type<tc>, window_params = [{transform_indices = @transform_0, window_bounds = array<i64: 1, 4, 256>}, {transform_indices = @transform_1, window_bounds = array<i64: 1, 4, 256>}]} {
    %c0 = arith.constant 0 : index
    %c0_0 = arith.constant 0 : index
    %c0_1 = arith.constant 0 : index
    %0 = vector.load %arg1[%c0, %c0_0, %c0_1] : memref<1x4x256xf32, #tpu.memory_space<vmem>>, vector<1x4x256xf32>
    %cst = arith.constant dense<0.000000e+00> : vector<1x4xf32>
    %1 = vector.multi_reduction <add>, %0, %cst [2] : vector<1x4x256xf32> to vector<1x4xf32>
    %2 = vector.shape_cast %1 : vector<1x4xf32> to vector<1x4x1xf32>
    %cst_2 = arith.constant 3.906250e-03 : f32
    %3 = vector.broadcast %cst_2 : f32 to vector<1x4x1xf32>
    %4 = arith.mulf %2, %3 : vector<1x4x1xf32>
    %cst_3 = arith.constant dense<0.000000e+00> : vector<1x1xf32>
    %5 = vector.multi_reduction <add>, %4, %cst_3 [1] : vector<1x4x1xf32> to vector<1x1xf32>
    %6 = vector.shape_cast %5 : vector<1x1xf32> to vector<1x1x1xf32>
    %cst_4 = arith.constant 4.000000e+00 : f32
    %7 = vector.broadcast %cst_4 : f32 to vector<1x1x1xf32>
    %8 = arith.divf %6, %7 : vector<1x1x1xf32>
    %9 = arith.mulf %4, %4 : vector<1x4x1xf32>
    %cst_5 = arith.constant dense<0.000000e+00> : vector<1x1xf32>
    %10 = vector.multi_reduction <add>, %9, %cst_5 [1] : vector<1x4x1xf32> to vector<1x1xf32>
    %11 = vector.shape_cast %10 : vector<1x1xf32> to vector<1x1x1xf32>
    %cst_6 = arith.constant 4.000000e+00 : f32
    %12 = vector.broadcast %cst_6 : f32 to vector<1x1x1xf32>
    %13 = arith.divf %11, %12 : vector<1x1x1xf32>
    %14 = arith.mulf %8, %8 : vector<1x1x1xf32>
    %15 = arith.subf %13, %14 : vector<1x1x1xf32>
    %cst_7 = arith.constant 0.000000e+00 : f32
    %16 = vector.broadcast %cst_7 : f32 to vector<1x1x1xf32>
    %17 = arith.maximumf %15, %16 : vector<1x1x1xf32>
    %18 = vector.broadcast %8 : vector<1x1x1xf32> to vector<1x4x1xf32>
    %19 = arith.subf %4, %18 : vector<1x4x1xf32>
    %cst_8 = arith.constant 9.99999974E-6 : f32
    %20 = vector.broadcast %cst_8 : f32 to vector<1x1x1xf32>
    %21 = arith.addf %17, %20 : vector<1x1x1xf32>
    %22 = math.rsqrt %21 : vector<1x1x1xf32>
    %23 = vector.broadcast %22 : vector<1x1x1xf32> to vector<1x4x1xf32>
    %24 = arith.mulf %19, %23 : vector<1x4x1xf32>
    %25 = arith.mulf %24, %24 : vector<1x4x1xf32>
    %cst_9 = arith.constant 0.000000e+00 : f32
    %26 = vector.broadcast %cst_9 : f32 to vector<1x4x1xf32>
    %27 = arith.subf %26, %25 : vector<1x4x1xf32>
    %cst_10 = arith.constant 1.000000e+00 : f32
    %28 = vector.broadcast %cst_10 : f32 to vector<1x4x1xf32>
    %29 = arith.mulf %27, %28 : vector<1x4x1xf32>
    %30 = math.exp %29 : vector<1x4x1xf32>
    %31 = vector.broadcast %30 : vector<1x4x1xf32> to vector<1x4x256xf32>
    %32 = arith.mulf %0, %31 : vector<1x4x256xf32>
    %c0_11 = arith.constant 0 : index
    %c0_12 = arith.constant 0 : index
    %c0_13 = arith.constant 0 : index
    %33 = vector.load %arg2[%c0_11, %c0_12, %c0_13] : memref<1x4x256xf32, #tpu.memory_space<vmem>>, vector<1x4x256xf32>
    tpu.vector_store %arg2[%c0_11, %c0_12, %c0_13], %32 {strides = array<i32>} : memref<1x4x256xf32, #tpu.memory_space<vmem>>, vector<1x4x256xf32>,
    return
  }
  func.func @transform_0(%arg0: i32) -> (i32, i32, i32) {
    %c0_i32 = arith.constant 0 : i32
    %c0_i32_0 = arith.constant 0 : i32
    %c0_i32_1 = arith.constant 0 : i32
    return %arg0, %c0_i32, %c0_i32_0 : i32, i32, i32
  }
  func.func @transform_1(%arg0: i32) -> (i32, i32, i32) {
    %c0_i32 = arith.constant 0 : i32
    %c0_i32_0 = arith.constant 0 : i32
    %c0_i32_1 = arith.constant 0 : i32
    return %arg0, %c0_i32, %c0_i32_0 : i32, i32, i32
  }
}

</mosaic_0001>

<llo_original>
// kernel: tpu_custom_call.1
$region0: #{tpu_custom_call.1}
  #allocation0 [shape = 'u32[]', space=smem, size = 0x4, offset = 0x4, fixed_abs, tag = 'smem constant byte address 0x4 - core index']
  #allocation1 [shape = 'u32[72,128]{1,0:T(1,128)}', space=vmem, size = 0x9000, scoped, tag = 'internal scratch']
  %s0 = inlined_call_operand.hbm [shape: f32[2,4,256], index: 0, kind: input, shape index: {}]
  %s1 = inlined_call_operand.hbm [shape: f32[2,4,256], index: 1, kind: output, shape index: {}]
  %s2 = sld [smem:[#allocation0]]
  $region41: #{tpu_custom_call.1} parent=0
    _
  %s4 = ssub.s32 1, %s2
  %s5 = scalar_select 0, %s4, %s2
  $region1: #{tpu_custom_call.1} parent=0
    #allocation2 [shape = 'u8[8192]{0}', space=vmem, size = 0x2000, scoped, tag = 'input window, operand 0']
    #allocation3 [shape = 's32[2]{0}', space=sflag, size = 0x8, scoped, tag = 'scoped memory for tpu_custom_call.1']
    #allocation4 [shape = 's32[2]{0}', space=sflag, size = 0x8, scoped, tag = 'scoped memory for tpu_custom_call.1']
    #allocation5 [shape = 'u8[8192]{0}', space=vmem, size = 0x2000, scoped, tag = 'output window, operand 0']
    %6 = vsyncpa [#allocation3], 0
    %s7 = scalar_lea.sflag [#allocation3], 1
    %8 = vsyncpa %s7, 0
    %9 = vsyncpa [#allocation4], 0
    %s10 = scalar_lea.sflag [#allocation4], 1
    %11 = vsyncpa %s10, 0
    loop: start=0, step=1, limit=4
    $region2: #{tpu_custom_call.1} parent=1 // loop_pre_header
      _
    $region3: #{tpu_custom_call.1} parent=1 // loop_header
      %s13 = sphi 0, %s17
      %p14 = scmp.ge.s32.totalorder %s13, 4
      %s23 = sphi 0, %s25
      %s26 = sphi 0, %s23
      %s27 = sphi 0, %s26
      %s43 = sphi 0, %s27
      %s49 = sphi 0, %s51
      %s52 = sphi 0, %s49
      %s53 = sphi 0, %s52
      %s69 = sphi 0, %s53
    $region4: #{tpu_custom_call.1} parent=1 // loop_header_branch
      %16 = sbr.rel (%p14) target = $region8
    $region5: #{tpu_custom_call.1} parent=1 // loop_body
      %s18 = ssub.s32 %s13, 1
      %s19 = ssub.s32 %s13, 2
      %s20 = sadd.s32 %s13, 1
      %s21 = ssub.s32 %s13, %s20
      %p22 = scmp.eq.s32.totalorder %s21, 0
      %s24 = sadd.s32 %s23, 1
      %s25 = scalar_select %p22, %s23, %s24
      %p28 = pneg %p22
      %p29 = scmp.eq.s32.totalorder %s13, 1
      %p30 = por %p28, %p29
      %p31 = scmp.ne.s32.totalorder %s23, %s26
      %p32 = scmp.eq.s32.totalorder %s13, 0
      %p33 = por %p31, %p32
      %p34 = scmp.ne.s32.totalorder %s23, %s26
      %p35 = scmp.eq.s32.totalorder %s18, 1
      %p36 = por %p34, %p35
      %p37 = scmp.ne.s32.totalorder %s26, %s27
      %p38 = scmp.eq.s32.totalorder %s18, 0
      %p39 = por %p37, %p38
      %p40 = scmp.ne.s32.totalorder %s26, %s27
      %p41 = scmp.eq.s32.totalorder %s19, 1
      %p42 = por %p40, %p41
      %p44 = scmp.ne.s32.totalorder %s27, %s43
      %p45 = scmp.eq.s32.totalorder %s19, 0
      %p46 = por %p44, %p45
      %s47 = ssub.s32 %s13, %s20
      %p48 = scmp.eq.s32.totalorder %s47, 0
      %s50 = sadd.s32 %s49, 1
      %s51 = scalar_select %p48, %s49, %s50
      %p54 = pneg %p48
      %p55 = scmp.eq.s32.totalorder %s13, 1
      %p56 = por %p54, %p55
      %p57 = scmp.ne.s32.totalorder %s49, %s52
      %p58 = scmp.eq.s32.totalorder %s13, 0
      %p59 = por %p57, %p58
      %p60 = scmp.ne.s32.totalorder %s49, %s52
      %p61 = scmp.eq.s32.totalorder %s18, 1
      %p62 = por %p60, %p61
      %p63 = scmp.ne.s32.totalorder %s52, %s53
      %p64 = scmp.eq.s32.totalorder %s18, 0
      %p65 = por %p63, %p64
      %p66 = scmp.ne.s32.totalorder %s52, %s53
      %p67 = scmp.eq.s32.totalorder %s19, 1
      %p68 = por %p66, %p67
      %p70 = scmp.ne.s32.totalorder %s53, %s69
      %p71 = scmp.eq.s32.totalorder %s19, 0
      %p72 = por %p70, %p71
      %p73 = scmp.le.s32.totalorder 1, %s13
      %p74 = scmp.lt.s32.totalorder %s13, 3
      %p75 = pnand %p73, %p74
      %p76 = pneg %p75
      // Predicated region
      $region9: #{tpu_custom_call.1} parent=5 // pred_check
        _
      $region10: #{tpu_custom_call.1} parent=5 // pred_check_branch
        %78 = sbr.rel (%p75) target = $region12
      $region11: #{tpu_custom_call.1} parent=5 // pred_region
        %s79 = ssub.s32 %s13, 1
      $region12: #{tpu_custom_call.1} parent=5 // pred_fallthru
        _
      %p80 = scmp.lt.s32.totalorder %s13, 2
      // Predicated region
      $region13: #{tpu_custom_call.1} parent=5 // pred_check
        %p81 = pneg %p80
      $region14: #{tpu_custom_call.1} parent=5 // pred_check_branch
        %83 = sbr.rel (%p81) target = $region16
      $region15: #{tpu_custom_call.1} parent=5 // pred_region
        // Predicated region
        $region17: #{tpu_custom_call.1} parent=15 // pred_check
          %p84 = pneg %p33
        $region18: #{tpu_custom_call.1} parent=15 // pred_check_branch
          %86 = sbr.rel (%p84) target = $region20
        $region19: #{tpu_custom_call.1} parent=15 // pred_region
          %s87 = sand.u32 %s23, 1
          %s88 = scalar_lea.sflag [#allocation3], %s87
          %s89 = sand.u32 %s23, 1
          %s90 = smul.addr %s89, 8
          %s91 = scalar_lea.vmem [#allocation2], %s90
          %93 = vsyncadd %s88, 0
          %s94 = smul.addr %s13, 2
          %s95 = smul.addr %s94, 4
          %s96 = scalar_lea.hbm %s0, %s95
          %s98 = sshll.u32 %s96, 4
          %s99 = int_to_ptr.hbm [resolvable:$true] %s98
          %s100 = sshll.u32 %s91, 4
          %s101 = int_to_ptr.vmem [resolvable:$true] %s100
          %103 = dma.hbm_to_vmem [thread:$0]  %s99, 128, %s101, %s88
        $region20: #{tpu_custom_call.1} parent=15 // pred_fallthru
          _
      $region16: #{tpu_custom_call.1} parent=5 // pred_fallthru
        _
      %p104 = scmp.le.s32.totalorder 1, %s13
      %p105 = scmp.lt.s32.totalorder %s13, 3
      %p106 = pnand %p104, %p105
      %p107 = pneg %p106
      // Predicated region
      $region21: #{tpu_custom_call.1} parent=5 // pred_check
        _
      $region22: #{tpu_custom_call.1} parent=5 // pred_check_branch
        %109 = sbr.rel (%p106) target = $region24
      $region23: #{tpu_custom_call.1} parent=5 // pred_region
        %s110 = ssub.s32 %s13, 1
        %s111 = sand.u32 %s26, 1
        %s112 = scalar_lea.sflag [#allocation3], %s111
        %s113 = sand.u32 %s26, 1
        %s114 = smul.addr %s113, 8
        %s115 = scalar_lea.vmem [#allocation2], %s114
        // Predicated region
        $region25: #{tpu_custom_call.1} parent=23 // pred_check
          %p116 = pneg %p39
        $region26: #{tpu_custom_call.1} parent=23 // pred_check_branch
          %118 = sbr.rel (%p116) target = $region28
        $region27: #{tpu_custom_call.1} parent=23 // pred_region
          %120 = dma.done %s112, 128
        $region28: #{tpu_custom_call.1} parent=23 // pred_fallthru
          _
        %s121 = sand.u32 %s26, 1
        %s122 = scalar_lea.sflag [#allocation3], %s121
        %s123 = sand.u32 %s26, 1
        %s124 = smul.addr %s123, 8
        %s125 = scalar_lea.vmem [#allocation2], %s124
        %p126 = pneg %p39
        %p127 = pneg %p36
        %p128 = pneg %p65
        %p129 = pneg %p62
        %s130 = sand.u32 %s52, 1
        %s131 = scalar_lea.sflag [#allocation4], %s130
        %s132 = sand.u32 %s52, 1
        %s133 = smul.addr %s132, 8
        %s134 = scalar_lea.vmem [#allocation5], %s133
        %v135 = vld [vmem:[%s115] sm:$0xff]
        %137 = vst [vmem:[#allocation1] ss:$2 sm:$0xff] %v135
        %v138 = vld.sshfl [vmem:[#allocation1] sm:$0xff pattern:$0x75316420]
        %v139 = vld.sshfl [vmem:[#allocation1 + $0x8] sm:$0xff pattern:$0x75316420]
        %vm142 = vcmask 1043456
        %v143 = vsel %vm142, %v138, 0.0
        %v144 = vsel %vm142, %v139, 0.0
        %v145 = vadd.f32 %v143, %v144
        %146 = vadd.xlane.f32.xlu0 %v145
        %v147 = vpop.xlane.xlu0 %146
        %v148 = vmul.f32 %v147, 0.00390625
        %v149 = vsel %vm142, %v148, 0.0
        %v150 = vrot.slane %v149, 4
        %v151 = vadd.f32 %v149, %v150
        %v152 = vrot.slane %v151, 2
        %v153 = vadd.f32 %v151, %v152
        %v154 = vrot.slane %v153, 1
        %v155 = vadd.f32 %v153, %v154
        %v156 = vrcp.pop 4.0
        %v157 = vmul.f32 4.0, %v156
        %v158 = vsub.f32 1.0, %v157
        %v159 = vmul.f32 %v156, %v158
        %v160 = vadd.f32 %v156, %v159
        %vm161 = vweird.f32 %v156
        %v162 = vsel %vm161, %v156, %v160
        %v163 = vmul.f32 %v155, %v162
        %v164 = vmul.f32 %v148, %v148
        %v165 = vsel %vm142, %v164, 0.0
        %v166 = vrot.slane %v165, 4
        %v167 = vadd.f32 %v165, %v166
        %v168 = vrot.slane %v167, 2
        %v169 = vadd.f32 %v167, %v168
        %v170 = vrot.slane %v169, 1
        %v171 = vadd.f32 %v169, %v170
        %v172 = vmul.f32 %v171, %v162
        %v173 = vmul.f32 %v163, %v163
        %v174 = vsub.f32 %v172, %v173
        %v175 = vmax.f32 %v174, 0.0
        %v176 = vsub.f32 %v148, %v163
        %v177 = vadd.f32 %v175, 1e-05
        %v178 = vrsqrt.pop %v177
        %v179 = vmul.f32 %v178, %v177
        %v180 = vmul.f32 %v179, %v178
        %v181 = vmul.f32 0.5, %v180
        %v182 = vsub.f32 1.5, %v181
        %v183 = vmul.f32 %v178, %v182
        %vm184 = vweird.f32 %v177
        %vm185 = vweird.f32 %v178
        %vm186 = vmor %vm184, %vm185
        %v187 = vsel %vm186, %v178, %v183
        %v188 = vmul.f32 %v176, %v187
        %v189 = vmul.f32 %v188, %v188
        %v190 = vsub.f32 0.0, %v189
        %v191 = vmul.f32 %v190, 1.442695
        %v192 = vpow.pop %v191
        %v195 = vunpack.c.l.s4 839922192
        %v196 = vunpack.c.0.s8 %v195
        %v197 = vperm.slane %v192, %v196
        %v199 = vmul.f32 %v135, %v197
        %200 = vst [vmem:[%s134] sm:$0xff] %v199
        %s201 = sand.u32 %s52, 1
        %s202 = scalar_lea.sflag [#allocation4], %s201
        %s203 = sand.u32 %s52, 1
        %s204 = smul.addr %s203, 8
        %s205 = scalar_lea.vmem [#allocation5], %s204
        // Predicated region
        $region29: #{tpu_custom_call.1} parent=23 // pred_check
          %p206 = pneg %p62
        $region30: #{tpu_custom_call.1} parent=23 // pred_check_branch
          %208 = sbr.rel (%p206) target = $region32
        $region31: #{tpu_custom_call.1} parent=23 // pred_region
          %210 = vsyncadd %s202, 0
          %s211 = smul.addr %s18, 2
          %s212 = smul.addr %s211, 4
          %s213 = scalar_lea.hbm %s1, %s212
          %s215 = sshll.u32 %s205, 4
          %s216 = int_to_ptr.vmem [resolvable:$true] %s215
          %s217 = sshll.u32 %s213, 4
          %s218 = int_to_ptr.hbm [resolvable:$true] %s217
          %220 = dma.vmem_to_hbm [thread:$0]  %s216, 128, %s218, %s202
        $region32: #{tpu_custom_call.1} parent=23 // pred_fallthru
          _
      $region24: #{tpu_custom_call.1} parent=5 // pred_fallthru
        _
      %p221 = scmp.le.s32.totalorder 2, %s13
      // Predicated region
      $region33: #{tpu_custom_call.1} parent=5 // pred_check
        %p222 = pneg %p221
      $region34: #{tpu_custom_call.1} parent=5 // pred_check_branch
        %224 = sbr.rel (%p222) target = $region36
      $region35: #{tpu_custom_call.1} parent=5 // pred_region
        %s225 = ssub.s32 %s13, 2
        // Predicated region
        $region37: #{tpu_custom_call.1} parent=35 // pred_check
          %p226 = pneg %p68
        $region38: #{tpu_custom_call.1} parent=35 // pred_check_branch
          %228 = sbr.rel (%p226) target = $region40
        $region39: #{tpu_custom_call.1} parent=35 // pred_region
          %s229 = sand.u32 %s53, 1
          %s230 = scalar_lea.sflag [#allocation4], %s229
          %s231 = sand.u32 %s53, 1
          %s232 = smul.addr %s231, 8
          %s233 = scalar_lea.vmem [#allocation5], %s232
          %235 = dma.done %s230, 128
        $region40: #{tpu_custom_call.1} parent=35 // pred_fallthru
          _
      $region36: #{tpu_custom_call.1} parent=5 // pred_fallthru
        _
    $region6: #{tpu_custom_call.1} parent=1 // loop_footer
      %s17 = sadd.s32 1, %s13
    $region7: #{tpu_custom_call.1} parent=1 // loop_footer_branch
      %12 = sbr.rel target = $region3
    $region8: #{tpu_custom_call.1} parent=1 // loop_exit
      _
    %236 = vsyncpa [#allocation3], 1
    %s237 = scalar_lea.sflag [#allocation3], 1
    %238 = vsyncpa %s237, 1
    %239 = vsyncpa [#allocation4], 1
    %s240 = scalar_lea.sflag [#allocation4], 1
    %241 = vsyncpa %s240, 1

</llo_original>
